<compile_context>
chip_gen: v7x
topology: tpu7x:2x2x1
jax: 0.10.0
libtpu: 0.0.40
codegen_flags: <defaults>
</compile_context>

<pallas_src>
import functools

import jax
import jax.numpy as jnp
from jax import lax
from jax.experimental import pallas as pl
from jax.experimental.pallas import tpu as pltpu


def _round_up(a, m):
    return ((a + m - 1) // m) * m


def _conv1d_same_kernel(x_ref, xh_ref, w_ref, b_ref, o_ref, xt_s, x2_s, *,
                        K, dilation, Cin, Cpad, TL, TLh, TC):
    # x_ref : (1, Cin, TL)        main input tile (globally 'same'-left-padded already)
    # xh_ref: (1, Cin, TLh)       halo = the TLh lanes following the main tile
    # w_ref : (Cout, K*Cpad)      weight, tap-major, Cin zero-padded to Cpad per tap
    # b_ref : (Cout, 1)           bias (zeros when bias=False)
    # o_ref : (1, Cout, TL)       output tile (lane-dense stores)
    # xt_s  : (Cin, TC + TLh)     VMEM staging of [last TC lanes of main tile | halo]
    # x2_s  : (K*Cpad, TC)        VMEM im2col staging for one lane chunk
    if Cpad != Cin:
        # zero once so the padding rows contribute nothing to the contraction
        x2_s[...] = jnp.zeros(x2_s.shape, x2_s.dtype)

    # Stage only the tail of the tile + halo (aligned full-width copies); tap windows that
    # spill past the main tile read from this contiguous staging buffer.
    xt_s[:, :TC] = x_ref[0, :, TL - TC:]
    xt_s[:, TC:] = xh_ref[0]

    w2 = w_ref[...]                                   # (Cout, K*Cpad)
    bias = b_ref[...].astype(jnp.float32)             # (Cout, 1)

    n_chunks = TL // TC
    for c in range(n_chunks):                         # static, fully unrolled
        base = c * TC
        for k in range(K):                            # assemble K shifted taps (im2col)
            s = base + k * dilation
            if s + TC <= TL:                          # static branch: window inside main tile
                src = x_ref[0, :, s:s + TC]
            else:                                     # window spills into the halo
                t = s - (TL - TC)
                src = xt_s[:, t:t + TC]
            x2_s[k * Cpad:k * Cpad + Cin, :] = src
        acc = lax.dot_general(                        # one MXU contraction over K*Cpad
            w2, x2_s[...],
            dimension_numbers=(((1,), (0,)), ((), ())),
            preferred_element_type=jnp.float32)       # (Cout, TC), f32 accumulation
        o_ref[0, :, base:base + TC] = (acc + bias).astype(o_ref.dtype)


def conv1d_same(x, w, b=None, *, dilation=1, tile_l=8192, chunk_l=512):
    """F.conv1d(x, w, padding='same', dilation=dilation) + optional bias, via Pallas.

    x: (B, Cin, L)   [NCL, PyTorch convention]
    w: (Cout, Cin, K)
    b: (Cout,) or None
    returns (B, Cout, L)
    """
    B, Cin, L = x.shape
    Cout, Cin_w, K = w.shape
    assert Cin_w == Cin

    total = dilation * (K - 1)                 # PyTorch 'same': left = total//2, rest right
    pad_l = total // 2

    # Sublane alignment for this dtype (8 rows for 4-byte, 16 for 2-byte, ...).
    itemsize = jnp.dtype(x.dtype).itemsize
    row_align = 8 * max(1, 4 // itemsize)
    Cpad = _round_up(Cin, row_align)

    TLh = _round_up(max(total, 1), 128)        # halo width (lanes), >= total, lane-aligned
    TC = _round_up(max(chunk_l, TLh), TLh)     # inner chunk width, multiple of TLh
    TL = max(TC, min(_round_up(L, TC), _round_up(tile_l, TC)))  # lanes per grid step
    halo_stride = TL // TLh                    # halo block index stride (TL % TLh == 0)

    num_tiles = pl.cdiv(L, TL)
    L_out_pad = num_tiles * TL
    L_in_pad = L_out_pad + TLh

    # 'same' padding + tile/halo padding, along L only (no transposes, no channel padding).
    xp = jnp.pad(x, ((0, 0), (0, 0), (pad_l, L_in_pad - L - pad_l)))

    # Weight as (Cout, K*Cpad), tap-major with zero-padded channel rows, matching the
    # im2col row layout built in the kernel.
    wt = jnp.transpose(w, (0, 2, 1)).astype(x.dtype)            # (Cout, K, Cin)
    wt = jnp.pad(wt, ((0, 0), (0, 0), (0, Cpad - Cin)))         # (Cout, K, Cpad)
    w2 = wt.reshape(Cout, K * Cpad)
    if b is None:
        b = jnp.zeros((Cout,), x.dtype)
    b2 = b.astype(x.dtype).reshape(Cout, 1)

    kernel = functools.partial(_conv1d_same_kernel, K=K, dilation=dilation,
                               Cin=Cin, Cpad=Cpad, TL=TL, TLh=TLh, TC=TC)

    out = pl.pallas_call(
        kernel,
        out_shape=jax.ShapeDtypeStruct((B, Cout, L_out_pad), x.dtype),
        grid=(B, num_tiles),
        in_specs=[
            pl.BlockSpec((1, Cin, TL), lambda bb, j: (bb, 0, j)),            # main tile
            pl.BlockSpec((1, Cin, TLh),
                         lambda bb, j: (bb, 0, (j + 1) * halo_stride)),      # halo
            pl.BlockSpec((Cout, K * Cpad), lambda bb, j: (0, 0)),            # weight
            pl.BlockSpec((Cout, 1), lambda bb, j: (0, 0)),                   # bias
        ],
        out_specs=pl.BlockSpec((1, Cout, TL), lambda bb, j: (bb, 0, j)),
        scratch_shapes=[
            pltpu.VMEM((Cin, TC + TLh), x.dtype),      # tail + halo staging
            pltpu.VMEM((K * Cpad, TC), x.dtype),       # im2col chunk
        ],
        compiler_params=pltpu.CompilerParams(
            dimension_semantics=("parallel", "parallel")),
    )(xp, xp, w2, b2)

    if L_out_pad != L:
        out = out[:, :, :L]
    return out


def make_conv1d_params(key, in_channels, out_channels, kernel=1, bias=False,
                       init_mode='kaiming_normal', init_weight=1.0, init_bias=0.0):
    """Deterministic re-implementation of the module's weight_init."""
    fan_in = in_channels * kernel
    kw, kb = jax.random.split(key)
    if init_mode == 'kaiming_normal':
        w = jnp.sqrt(1.0 / fan_in) * jax.random.normal(
            kw, (out_channels, in_channels, kernel), dtype=jnp.float32)
        b = jnp.sqrt(1.0 / fan_in) * jax.random.normal(
            kb, (out_channels,), dtype=jnp.float32) if bias else None
    elif init_mode == 'kaiming_uniform':
        w = jnp.sqrt(3.0 / fan_in) * jax.random.uniform(
            kw, (out_channels, in_channels, kernel), dtype=jnp.float32,
            minval=-1.0, maxval=1.0)
        b = jnp.sqrt(3.0 / fan_in) * jax.random.uniform(
            kb, (out_channels,), dtype=jnp.float32,
            minval=-1.0, maxval=1.0) if bias else None
    else:
        raise ValueError(f'Invalid init mode "{init_mode}"')
    w = w * init_weight
    if b is not None:
        b = b * init_bias
    return w, b


def _reference_conv1d_same(x, w, b, dilation):
    """Pure-JAX reference (lax conv) for correctness checking."""
    K = w.shape[-1]
    total = dilation * (K - 1)
    pad_l = total // 2
    pad_r = total - pad_l
    out = lax.conv_general_dilated(
        x, w,
        window_strides=(1,),
        padding=[(pad_l, pad_r)],
        rhs_dilation=(dilation,),
        dimension_numbers=('NCH', 'OIH', 'NCH'),
    )
    if b is not None:
        out = out + b.reshape(1, -1, 1)
    return out


if __name__ == "__main__":
    key = jax.random.PRNGKey(0)
    k_x, k_p, k_x2 = jax.random.split(key, 3)

    # Config consistent with the module: Conv1d(in=4, out=8, kernel=3, dilation=2, bias=True)
    B, Cin, Cout, L, K, dilation = 2, 4, 8, 16, 3, 2

    x = jax.random.normal(k_x, (B, Cin, L), dtype=jnp.float32)
    w, b = make_conv1d_params(k_p, Cin, Cout, kernel=K, bias=True,
                              init_mode='kaiming_normal', init_weight=1.0, init_bias=1.0)

    out = jax.block_until_ready(conv1d_same(x, w, b, dilation=dilation))
    ref = _reference_conv1d_same(x, w, b, dilation)
    assert out.shape == (B, Cout, L)
    assert jnp.allclose(out, ref, atol=1e-5, rtol=1e-5), "mismatch vs lax.conv reference"

    # Longer input with small tiles: exercises multi-L-tile gridding, the halo block,
    # multi-chunk inner loop and output un-padding.
    L2 = 1600
    x2 = jax.random.normal(k_x2, (B, Cin, L2), dtype=jnp.float32)
    out2 = jax.block_until_ready(
        conv1d_same(x2, w, b, dilation=dilation, tile_l=512, chunk_l=256))
    ref2 = _reference_conv1d_same(x2, w, b, dilation)
    assert out2.shape == (B, Cout, L2)
    assert jnp.allclose(out2, ref2, atol=1e-5, rtol=1e-5), "mismatch (multi-tile) vs reference"

    # Default module config (kernel=1, bias=False, dilation=1) also goes through the kernel.
    w1, _ = make_conv1d_params(k_p, Cin, Cout, kernel=1, bias=False)
    out3 = jax.block_until_ready(conv1d_same(x, w1, None, dilation=1))
    ref3 = _reference_conv1d_same(x, w1, None, 1)
    assert jnp.allclose(out3, ref3, atol=1e-5, rtol=1e-5), "mismatch (kernel=1) vs reference"

    print("KERNEL_OK")
</pallas_src>

<mosaic_0001>
module attributes {stable_mosaic.version = 11 : i64} {
  func.func @_conv1d_same_kernel(%arg0: i32, %arg1: i32, %arg2: memref<1x4x512xf32, #tpu.memory_space<vmem>>, %arg3: memref<1x4x128xf32, #tpu.memory_space<vmem>>, %arg4: memref<8x24xf32, #tpu.memory_space<vmem>>, %arg5: memref<8x1xf32, #tpu.memory_space<vmem>>, %arg6: memref<1x8x512xf32, #tpu.memory_space<vmem>>, %arg7: memref<4x640xf32, #tpu.memory_space<vmem>>, %arg8: memref<24x512xf32, #tpu.memory_space<vmem>>) attributes {dimension_semantics = [#tpu.dimension_semantics<parallel>, #tpu.dimension_semantics<parallel>], iteration_bounds = array<i64: 2, 1>, scalar_prefetch = 0 : i64, scratch_operands = 2 : i64, tpu.core_type = #tpu.core_type<tc>, window_params = [{transform_indices = @transform_0, window_bounds = array<i64: 1, 4, 512>}, {transform_indices = @transform_1, window_bounds = array<i64: 1, 4, 128>}, {pipeline_mode = #tpu.pipeline_mode<synchronous>, transform_indices = @transform_2, window_bounds = array<i64: 8, 24>}, {pipeline_mode = #tpu.pipeline_mode<synchronous>, transform_indices = @transform_3, window_bounds = array<i64: 8, 1>}, {transform_indices = @transform_4, window_bounds = array<i64: 1, 8, 512>}]} {
    %cst = arith.constant 0.000000e+00 : f32
    %0 = vector.broadcast %cst : f32 to vector<24x512xf32>
    %c0 = arith.constant 0 : index
    %c0_0 = arith.constant 0 : index
    %1 = vector.load %arg8[%c0, %c0_0] : memref<24x512xf32, #tpu.memory_space<vmem>>, vector<24x512xf32>
    tpu.vector_store %arg8[%c0, %c0_0], %0 {strides = array<i32>} : memref<24x512xf32, #tpu.memory_space<vmem>>, vector<24x512xf32>,
    %c0_1 = arith.constant 0 : index
    %c0_2 = arith.constant 0 : index
    %c0_3 = arith.constant 0 : index
    %2 = vector.load %arg2[%c0_1, %c0_2, %c0_3] : memref<1x4x512xf32, #tpu.memory_space<vmem>>, vector<1x4x512xf32>
    %3 = vector.shape_cast %2 : vector<1x4x512xf32> to vector<4x512xf32>
    %c0_4 = arith.constant 0 : index
    %c0_5 = arith.constant 0 : index
    %4 = vector.load %arg7[%c0_4, %c0_5] : memref<4x640xf32, #tpu.memory_space<vmem>>, vector<4x512xf32>
    tpu.vector_store %arg7[%c0_4, %c0_5], %3 {strides = array<i32>} : memref<4x640xf32, #tpu.memory_space<vmem>>, vector<4x512xf32>,
    %c0_6 = arith.constant 0 : index
    %c0_7 = arith.constant 0 : index
    %c0_8 = arith.constant 0 : index
    %5 = vector.load %arg3[%c0_6, %c0_7, %c0_8] : memref<1x4x128xf32, #tpu.memory_space<vmem>>, vector<1x4x128xf32>
    %6 = vector.shape_cast %5 : vector<1x4x128xf32> to vector<4x128xf32>
    %c0_9 = arith.constant 0 : index
    %c512 = arith.constant 512 : index
    %7 = vector.load %arg7[%c0_9, %c512] : memref<4x640xf32, #tpu.memory_space<vmem>>, vector<4x128xf32>
    tpu.vector_store %arg7[%c0_9, %c512], %6 {strides = array<i32>} : memref<4x640xf32, #tpu.memory_space<vmem>>, vector<4x128xf32>,
    %c0_10 = arith.constant 0 : index
    %c0_11 = arith.constant 0 : index
    %8 = vector.load %arg4[%c0_10, %c0_11] : memref<8x24xf32, #tpu.memory_space<vmem>>, vector<8x24xf32>
    %c0_12 = arith.constant 0 : index
    %c0_13 = arith.constant 0 : index
    %9 = vector.load %arg5[%c0_12, %c0_13] : memref<8x1xf32, #tpu.memory_space<vmem>>, vector<8x1xf32>
    %c0_14 = arith.constant 0 : index
    %c0_15 = arith.constant 0 : index
    %c0_16 = arith.constant 0 : index
    %10 = vector.load %arg2[%c0_14, %c0_15, %c0_16] : memref<1x4x512xf32, #tpu.memory_space<vmem>>, vector<1x4x512xf32>
    %11 = vector.shape_cast %10 : vector<1x4x512xf32> to vector<4x512xf32>
    %c0_17 = arith.constant 0 : index
    %c0_18 = arith.constant 0 : index
    %12 = vector.load %arg8[%c0_17, %c0_18] : memref<24x512xf32, #tpu.memory_space<vmem>>, vector<4x512xf32>
    tpu.vector_store %arg8[%c0_17, %c0_18], %11 {strides = array<i32>} : memref<24x512xf32, #tpu.memory_space<vmem>>, vector<4x512xf32>,
    %c0_19 = arith.constant 0 : index
    %c2 = arith.constant 2 : index
    %13 = vector.load %arg7[%c0_19, %c2] : memref<4x640xf32, #tpu.memory_space<vmem>>, vector<4x512xf32>
    %c8 = arith.constant 8 : index
    %c0_20 = arith.constant 0 : index
    %14 = vector.load %arg8[%c8, %c0_20] : memref<24x512xf32, #tpu.memory_space<vmem>>, vector<4x512xf32>
    tpu.vector_store %arg8[%c8, %c0_20], %13 {strides = array<i32>} : memref<24x512xf32, #tpu.memory_space<vmem>>, vector<4x512xf32>,
    %c0_21 = arith.constant 0 : index
    %c4 = arith.constant 4 : index
    %15 = vector.load %arg7[%c0_21, %c4] : memref<4x640xf32, #tpu.memory_space<vmem>>, vector<4x512xf32>
    %c16 = arith.constant 16 : index
    %c0_22 = arith.constant 0 : index
    %16 = vector.load %arg8[%c16, %c0_22] : memref<24x512xf32, #tpu.memory_space<vmem>>, vector<4x512xf32>
    tpu.vector_store %arg8[%c16, %c0_22], %15 {strides = array<i32>} : memref<24x512xf32, #tpu.memory_space<vmem>>, vector<4x512xf32>,
    %c0_23 = arith.constant 0 : index
    %c0_24 = arith.constant 0 : index
    %17 = vector.load %arg8[%c0_23, %c0_24] : memref<24x512xf32, #tpu.memory_space<vmem>>, vector<24x512xf32>
    %cst_25 = arith.constant dense<0.000000e+00> : vector<8x512xf32>
    %18 = tpu.matmul %8, %17, %cst_25 {dimension_numbers = #tpu.dot_dimension_numbers<[1], [0], [0], [1], [0, 0, 1, 1], [], []>} : vector<8x24xf32>, vector<24x512xf32>, vector<8x512xf32> -> vector<8x512xf32>
    %19 = vector.broadcast %9 : vector<8x1xf32> to vector<8x512xf32>
    %20 = arith.addf %18, %19 : vector<8x512xf32>
    %c0_26 = arith.constant 0 : index
    %c0_27 = arith.constant 0 : index
    %c0_28 = arith.constant 0 : index
    %21 = vector.load %arg6[%c0_26, %c0_27, %c0_28] : memref<1x8x512xf32, #tpu.memory_space<vmem>>, vector<1x8x512xf32>
    %22 = vector.shape_cast %21 : vector<1x8x512xf32> to vector<8x512xf32>
    %23 = vector.shape_cast %20 : vector<8x512xf32> to vector<1x8x512xf32>
    tpu.vector_store %arg6[%c0_26, %c0_27, %c0_28], %23 {strides = array<i32>} : memref<1x8x512xf32, #tpu.memory_space<vmem>>, vector<1x8x512xf32>,
    return
  }
  func.func @transform_0(%arg0: i32, %arg1: i32) -> (i32, i32, i32) {
    %c0_i32 = arith.constant 0 : i32
    %c0_i32_0 = arith.constant 0 : i32
    return %arg0, %c0_i32, %arg1 : i32, i32, i32
  }
  func.func @transform_1(%arg0: i32, %arg1: i32) -> (i32, i32, i32) {
    %c1_i32 = arith.constant 1 : i32
    %0 = arith.addi %arg1, %c1_i32 : i32
    %c4_i32 = arith.constant 4 : i32
    %1 = arith.muli %0, %c4_i32 : i32
    %c0_i32 = arith.constant 0 : i32
    %c0_i32_0 = arith.constant 0 : i32
    return %arg0, %c0_i32, %1 : i32, i32, i32
  }
  func.func @transform_2(%arg0: i32, %arg1: i32) -> (i32, i32) {
    %c0_i32 = arith.constant 0 : i32
    %c0_i32_0 = arith.constant 0 : i32
    %c0_i32_1 = arith.constant 0 : i32
    return %c0_i32, %c0_i32_0 : i32, i32
  }
  func.func @transform_3(%arg0: i32, %arg1: i32) -> (i32, i32) {
    %c0_i32 = arith.constant 0 : i32
    %c0_i32_0 = arith.constant 0 : i32
    %c0_i32_1 = arith.constant 0 : i32
    return %c0_i32, %c0_i32_0 : i32, i32
  }
  func.func @transform_4(%arg0: i32, %arg1: i32) -> (i32, i32, i32) {
    %c0_i32 = arith.constant 0 : i32
    %c0_i32_0 = arith.constant 0 : i32
    return %arg0, %c0_i32, %arg1 : i32, i32, i32
  }
}

</mosaic_0001>

<llo_original>
// kernel: tpu_custom_call.1
$region0: #{tpu_custom_call.1}
  #allocation0 [shape = 'u32[]', space=smem, size = 0x4, offset = 0x4, fixed_abs, tag = 'smem constant byte address 0x4 - core index']
  #allocation1 [shape = 'u32[144,128]{1,0:T(1,128)}', space=vmem, size = 0x12000, scoped, tag = 'internal scratch']
  #allocation2 [shape = 'f32[4,640]{1,0:T(4,128)}', space=vmem, size = 0x2800, scoped, tag = 'scratch operand']
  #allocation3 [shape = 'f32[24,512]{1,0:T(8,128)}', space=vmem, size = 0xc000, scoped, tag = 'scratch operand']
  %s0 = inlined_call_operand.hbm [shape: f32[2,4,640], index: 0, kind: input, shape index: {}]
  %s1 = inlined_call_operand.hbm [shape: f32[2,4,640], index: 1, kind: input, shape index: {}]
  %s2 = inlined_call_operand.vmem [shape: f32[8,24], index: 2, kind: input, shape index: {}]
  %s3 = inlined_call_operand.vmem [shape: f32[8,1], index: 3, kind: input, shape index: {}]
  %s4 = inlined_call_operand.hbm [shape: f32[2,8,512], index: 4, kind: output, shape index: {}]
  %s5 = sld [smem:[#allocation0]]
  $region57: #{tpu_custom_call.1} parent=0
    _
  %s7 = ssub.s32 1, %s5
  %s8 = scalar_select 0, %s7, %s5
  $region1: #{tpu_custom_call.1} parent=0
    #allocation4 [shape = 'u8[16384]{0}', space=vmem, size = 0x4000, scoped, tag = 'input window, operand 0']
    #allocation5 [shape = 's32[2]{0}', space=sflag, size = 0x8, scoped, tag = 'scoped memory for tpu_custom_call.1']
    #allocation6 [shape = 's32[2]{0}', space=sflag, size = 0x8, scoped, tag = 'scoped memory for tpu_custom_call.1']
    #allocation7 [shape = 'u8[4096]{0}', space=vmem, size = 0x1000, scoped, tag = 'input window, operand 1']
    #allocation8 [shape = 's32[2]{0}', space=sflag, size = 0x8, scoped, tag = 'scoped memory for tpu_custom_call.1']
    #allocation9 [shape = 'u8[32768]{0}', space=vmem, size = 0x8000, scoped, tag = 'output window, operand 0']
    %9 = vsyncpa [#allocation5], 0
    %s10 = scalar_lea.sflag [#allocation5], 1
    %11 = vsyncpa %s10, 0
    %12 = vsyncpa [#allocation8], 0
    %s13 = scalar_lea.sflag [#allocation8], 1
    %14 = vsyncpa %s13, 0
    %15 = vsyncpa [#allocation6], 0
    %s16 = scalar_lea.sflag [#allocation6], 1
    %17 = vsyncpa %s16, 0
    loop: start=0, step=1, limit=4
    $region2: #{tpu_custom_call.1} parent=1 // loop_pre_header
      _
    $region3: #{tpu_custom_call.1} parent=1 // loop_header
      %s19 = sphi 0, %s23
      %p20 = scmp.ge.s32.totalorder %s19, 4
      %s26 = sphi 0, %s38
      %s27 = sphi 0, %s34
      %s28 = sphi 0, %s26
      %s29 = sphi 0, %s27
      %s30 = sphi 0, %s28
      %s31 = sphi 0, %s29
      %s43 = sphi 0, %s45
      %s46 = sphi 0, %s43
      %s47 = sphi 0, %s46
      %s63 = sphi 0, %s47
      %s75 = sphi 0, %s77
      %s78 = sphi 0, %s75
      %s79 = sphi 0, %s78
      %s95 = sphi 0, %s79
      %s99 = sphi 0, %s99
      %s101 = sphi 0, %s99
      %s102 = sphi 0, %s101
      %s116 = sphi 0, %s102
      %s120 = sphi 0, %s120
      %s122 = sphi 0, %s120
      %s123 = sphi 0, %s122
      %s137 = sphi 0, %s123
      %s145 = sphi 0, %s147
      %s148 = sphi 0, %s145
      %s149 = sphi 0, %s148
      %s165 = sphi 0, %s149
    $region4: #{tpu_custom_call.1} parent=1 // loop_header_branch
      %22 = sbr.rel (%p20) target = $region8
    $region5: #{tpu_custom_call.1} parent=1 // loop_body
      %s24 = ssub.s32 %s19, 1
      %s25 = ssub.s32 %s19, 2
      %s32 = sadd.s32 1, %s27
      %p33 = scmp.ge.s32.totalorder %s32, 1
      %s34 = scalar_select %p33, 0, %s32
      %s35 = sadd.s32 1, %s26
      %s36 = scalar_select %p33, %s35, %s26
      %p37 = scmp.ge.s32.totalorder %s36, 2
      %s38 = scalar_select %p37, 0, %s36
      %s39 = ssub.s32 %s26, %s38
      %s40 = ssub.s32 %s27, %s34
      %s41 = sor.u32 %s39, %s40
      %p42 = scmp.eq.s32.totalorder %s41, 0
      %s44 = sadd.s32 %s43, 1
      %s45 = scalar_select %p42, %s43, %s44
      %p48 = pneg %p42
      %p49 = scmp.eq.s32.totalorder %s19, 1
      %p50 = por %p48, %p49
      %p51 = scmp.ne.s32.totalorder %s43, %s46
      %p52 = scmp.eq.s32.totalorder %s19, 0
      %p53 = por %p51, %p52
      %p54 = scmp.ne.s32.totalorder %s43, %s46
      %p55 = scmp.eq.s32.totalorder %s24, 1
      %p56 = por %p54, %p55
      %p57 = scmp.ne.s32.totalorder %s46, %s47
      %p58 = scmp.eq.s32.totalorder %s24, 0
      %p59 = por %p57, %p58
      %p60 = scmp.ne.s32.totalorder %s46, %s47
      %p61 = scmp.eq.s32.totalorder %s25, 1
      %p62 = por %p60, %p61
      %p64 = scmp.ne.s32.totalorder %s47, %s63
      %p65 = scmp.eq.s32.totalorder %s25, 0
      %p66 = por %p64, %p65
      %s67 = sadd.s32 %s27, 1
      %s68 = smul.u32 %s67, 4
      %s69 = sadd.s32 %s34, 1
      %s70 = smul.u32 %s69, 4
      %s71 = ssub.s32 %s26, %s38
      %s72 = ssub.s32 %s68, %s70
      %s73 = sor.u32 %s71, %s72
      %p74 = scmp.eq.s32.totalorder %s73, 0
      %s76 = sadd.s32 %s75, 1
      %s77 = scalar_select %p74, %s75, %s76
      %p80 = pneg %p74
      %p81 = scmp.eq.s32.totalorder %s19, 1
      %p82 = por %p80, %p81
      %p83 = scmp.ne.s32.totalorder %s75, %s78
      %p84 = scmp.eq.s32.totalorder %s19, 0
      %p85 = por %p83, %p84
      %p86 = scmp.ne.s32.totalorder %s75, %s78
      %p87 = scmp.eq.s32.totalorder %s24, 1
      %p88 = por %p86, %p87
      %p89 = scmp.ne.s32.totalorder %s78, %s79
      %p90 = scmp.eq.s32.totalorder %s24, 0
      %p91 = por %p89, %p90
      %p92 = scmp.ne.s32.totalorder %s78, %s79
      %p93 = scmp.eq.s32.totalorder %s25, 1
      %p94 = por %p92, %p93
      %p96 = scmp.ne.s32.totalorder %s79, %s95
      %p97 = scmp.eq.s32.totalorder %s25, 0
      %p98 = por %p96, %p97
      %s100 = sadd.s32 %s99, 1
      %p103 = scmp.eq.s32.totalorder %s19, 1
      %p104 = scmp.ne.s32.totalorder %s99, %s101
      %p105 = scmp.eq.s32.totalorder %s19, 0
      %p106 = por %p104, %p105
      %p107 = scmp.ne.s32.totalorder %s99, %s101
      %p108 = scmp.eq.s32.totalorder %s24, 1
      %p109 = por %p107, %p108
      %p110 = scmp.ne.s32.totalorder %s101, %s102
      %p111 = scmp.eq.s32.totalorder %s24, 0
      %p112 = por %p110, %p111
      %p113 = scmp.ne.s32.totalorder %s101, %s102
      %p114 = scmp.eq.s32.totalorder %s25, 1
      %p115 = por %p113, %p114
      %p117 = scmp.ne.s32.totalorder %s102, %s116
      %p118 = scmp.eq.s32.totalorder %s25, 0
      %p119 = por %p117, %p118
      %s121 = sadd.s32 %s120, 1
      %p124 = scmp.eq.s32.totalorder %s19, 1
      %p125 = scmp.ne.s32.totalorder %s120, %s122
      %p126 = scmp.eq.s32.totalorder %s19, 0
      %p127 = por %p125, %p126
      %p128 = scmp.ne.s32.totalorder %s120, %s122
      %p129 = scmp.eq.s32.totalorder %s24, 1
      %p130 = por %p128, %p129
      %p131 = scmp.ne.s32.totalorder %s122, %s123
      %p132 = scmp.eq.s32.totalorder %s24, 0
      %p133 = por %p131, %p132
      %p134 = scmp.ne.s32.totalorder %s122, %s123
      %p135 = scmp.eq.s32.totalorder %s25, 1
      %p136 = por %p134, %p135
      %p138 = scmp.ne.s32.totalorder %s123, %s137
      %p139 = scmp.eq.s32.totalorder %s25, 0
      %p140 = por %p138, %p139
      %s141 = ssub.s32 %s26, %s38
      %s142 = ssub.s32 %s27, %s34
      %s143 = sor.u32 %s141, %s142
      %p144 = scmp.eq.s32.totalorder %s143, 0
      %s146 = sadd.s32 %s145, 1
      %s147 = scalar_select %p144, %s145, %s146
      %p150 = pneg %p144
      %p151 = scmp.eq.s32.totalorder %s19, 1
      %p152 = por %p150, %p151
      %p153 = scmp.ne.s32.totalorder %s145, %s148
      %p154 = scmp.eq.s32.totalorder %s19, 0
      %p155 = por %p153, %p154
      %p156 = scmp.ne.s32.totalorder %s145, %s148
      %p157 = scmp.eq.s32.totalorder %s24, 1
      %p158 = por %p156, %p157
      %p159 = scmp.ne.s32.totalorder %s148, %s149
      %p160 = scmp.eq.s32.totalorder %s24, 0
      %p161 = por %p159, %p160
      %p162 = scmp.ne.s32.totalorder %s148, %s149
      %p163 = scmp.eq.s32.totalorder %s25, 1
      %p164 = por %p162, %p163
      %p166 = scmp.ne.s32.totalorder %s149, %s165
      %p167 = scmp.eq.s32.totalorder %s25, 0
      %p168 = por %p166, %p167
      %p169 = scmp.le.s32.totalorder 1, %s19
      %p170 = scmp.lt.s32.totalorder %s19, 3
      %p171 = pnand %p169, %p170
      %p172 = pneg %p171
      // Predicated region
      $region9: #{tpu_custom_call.1} parent=5 // pred_check
        _
      $region10: #{tpu_custom_call.1} parent=5 // pred_check_branch
        %174 = sbr.rel (%p171) target = $region12
      $region11: #{tpu_custom_call.1} parent=5 // pred_region
        %s175 = ssub.s32 %s19, 1
        // Predicated region
        $region13: #{tpu_custom_call.1} parent=11 // pred_check
          %p176 = pneg %p112
        $region14: #{tpu_custom_call.1} parent=11 // pred_check_branch
          %178 = sbr.rel (%p176) target = $region16
        $region15: #{tpu_custom_call.1} parent=11 // pred_region
          _
        $region16: #{tpu_custom_call.1} parent=11 // pred_fallthru
          _
        // Predicated region
        $region17: #{tpu_custom_call.1} parent=11 // pred_check
          %p179 = pneg %p133
        $region18: #{tpu_custom_call.1} parent=11 // pred_check_branch
          %181 = sbr.rel (%p179) target = $region20
        $region19: #{tpu_custom_call.1} parent=11 // pred_region
          _
        $region20: #{tpu_custom_call.1} parent=11 // pred_fallthru
          _
      $region12: #{tpu_custom_call.1} parent=5 // pred_fallthru
        _
      %p182 = scmp.lt.s32.totalorder %s19, 2
      // Predicated region
      $region21: #{tpu_custom_call.1} parent=5 // pred_check
        %p183 = pneg %p182
      $region22: #{tpu_custom_call.1} parent=5 // pred_check_branch
        %185 = sbr.rel (%p183) target = $region24
      $region23: #{tpu_custom_call.1} parent=5 // pred_region
        // Predicated region
        $region25: #{tpu_custom_call.1} parent=23 // pred_check
          %p186 = pneg %p53
        $region26: #{tpu_custom_call.1} parent=23 // pred_check_branch
          %188 = sbr.rel (%p186) target = $region28
        $region27: #{tpu_custom_call.1} parent=23 // pred_region
          %s189 = sand.u32 %s43, 1
          %s190 = scalar_lea.sflag [#allocation5], %s189
          %s191 = sand.u32 %s43, 1
          %s192 = smul.addr %s191, 16
          %s193 = scalar_lea.vmem [#allocation4], %s192
          %s194 = smul.u32 4, %s27
          %s195 = ssub.s32 5, %s194
          %p196 = scmp.lt.s32.totalorder %s195, 4
          %s197 = scalar_select %p196, %s195, 4
          %s198 = smul.u32 64, %s197
          %s200 = ssub.s32 256, %s198
          %201 = vsyncadd %s190, %s200
          %p202 = scmp.ne.s32.totalorder 0, %s198
          %s203 = smul.addr %s26, 5
          %s204 = sadd.s32 %s194, %s203
          %s205 = smul.addr %s204, 64
          %s206 = scalar_lea.hbm %s0, %s205
          %s207 = smul.u32 %s197, 4
          %s208 = sshll.u32 %s207, 4
          %s209 = sshll.u32 %s193, 4
          %s210 = int_to_ptr.vmem [resolvable:$true] %s209
          %212 = dma.hbm_to_vmem [thread:$0]  (%p202), %s206, %s208, %s210, %s190
        $region28: #{tpu_custom_call.1} parent=23 // pred_fallthru
          _
        // Predicated region
        $region29: #{tpu_custom_call.1} parent=23 // pred_check
          %p213 = pneg %p85
        $region30: #{tpu_custom_call.1} parent=23 // pred_check_branch
          %215 = sbr.rel (%p213) target = $region32
        $region31: #{tpu_custom_call.1} parent=23 // pred_region
          %s216 = sand.u32 %s75, 1
          %s217 = scalar_lea.sflag [#allocation8], %s216
          %s218 = sand.u32 %s75, 1
          %s219 = smul.addr %s218, 4
          %s220 = scalar_lea.vmem [#allocation7], %s219
          %s221 = sadd.s32 %s27, 1
          %s222 = smul.u32 %s221, 4
          %s224 = ssub.s32 64, 64
          %225 = vsyncadd %s217, %s224
          %s226 = smul.addr %s26, 5
          %s227 = sadd.s32 %s222, %s226
          %s228 = smul.addr %s227, 64
          %s229 = scalar_lea.hbm %s1, %s228
          %s231 = sshll.u32 %s220, 4
          %s232 = int_to_ptr.vmem [resolvable:$true] %s231
          %234 = dma.hbm_to_vmem [thread:$0]  %s229, 64, %s232, %s217
        $region32: #{tpu_custom_call.1} parent=23 // pred_fallthru
          _
      $region24: #{tpu_custom_call.1} parent=5 // pred_fallthru
        _
      %p235 = scmp.le.s32.totalorder 1, %s19
      %p236 = scmp.lt.s32.totalorder %s19, 3
      %p237 = pnand %p235, %p236
      %p238 = pneg %p237
      // Predicated region
      $region33: #{tpu_custom_call.1} parent=5 // pred_check
        _
      $region34: #{tpu_custom_call.1} parent=5 // pred_check_branch
        %240 = sbr.rel (%p237) target = $region36
      $region35: #{tpu_custom_call.1} parent=5 // pred_region
        %s241 = ssub.s32 %s19, 1
        %s242 = sand.u32 %s46, 1
        %s243 = scalar_lea.sflag [#allocation5], %s242
        %s244 = sand.u32 %s46, 1
        %s245 = smul.addr %s244, 16
        %s246 = scalar_lea.vmem [#allocation4], %s245
        // Predicated region
        $region37: #{tpu_custom_call.1} parent=35 // pred_check
          %p247 = pneg %p59
        $region38: #{tpu_custom_call.1} parent=35 // pred_check_branch
          %249 = sbr.rel (%p247) target = $region40
        $region39: #{tpu_custom_call.1} parent=35 // pred_region
          %250 = dma.done %s243, 256
        $region40: #{tpu_custom_call.1} parent=35 // pred_fallthru
          _
        %s251 = sand.u32 %s78, 1
        %s252 = scalar_lea.sflag [#allocation8], %s251
        %s253 = sand.u32 %s78, 1
        %s254 = smul.addr %s253, 4
        %s255 = scalar_lea.vmem [#allocation7], %s254
        // Predicated region
        $region41: #{tpu_custom_call.1} parent=35 // pred_check
          %p256 = pneg %p91
        $region42: #{tpu_custom_call.1} parent=35 // pred_check_branch
          %258 = sbr.rel (%p256) target = $region44
        $region43: #{tpu_custom_call.1} parent=35 // pred_region
          %259 = dma.done %s252, 64
        $region44: #{tpu_custom_call.1} parent=35 // pred_fallthru
          _
        %s260 = sand.u32 %s46, 1
        %s261 = scalar_lea.sflag [#allocation5], %s260
        %s262 = sand.u32 %s46, 1
        %s263 = smul.addr %s262, 16
        %s264 = scalar_lea.vmem [#allocation4], %s263
        %p265 = pneg %p59
        %p266 = pneg %p56
        %s267 = sand.u32 %s78, 1
        %s268 = scalar_lea.sflag [#allocation8], %s267
        %s269 = sand.u32 %s78, 1
        %s270 = smul.addr %s269, 4
        %s271 = scalar_lea.vmem [#allocation7], %s270
        %p272 = pneg %p91
        %p273 = pneg %p88
        %p274 = pneg %p112
        %p275 = pneg %p109
        %p276 = pneg %p133
        %p277 = pneg %p130
        %p278 = pneg %p161
        %p279 = pneg %p158
        %s280 = sand.u32 %s148, 1
        %s281 = scalar_lea.sflag [#allocation6], %s280
        %s282 = sand.u32 %s148, 1
        %s283 = smul.addr %s282, 32
        %s284 = scalar_lea.vmem [#allocation9], %s283
        %s285 = smul.u32 4, %s29
        %s286 = ssub.s32 5, %s285
        %p287 = scmp.lt.s32.totalorder %s286, 4
        %s288 = scalar_select %p287, %s286, 4
        %s289 = smul.u32 64, %s288
        %s290 = sadd.s32 %s29, 1
        %s291 = smul.u32 %s290, 4
        %s292 = smul.u32 4, %s29
        %293 = vst [vmem:[#allocation3] sm:$0xff] 0.0
        %294 = vst [vmem:[#allocation3 + $0x8] sm:$0xff] 0.0
        %295 = vst [vmem:[#allocation3 + $0x10] sm:$0xff] 0.0
        %296 = vst [vmem:[#allocation3 + $0x18] sm:$0xff] 0.0
        %297 = vst [vmem:[#allocation3 + $0x20] sm:$0xff] 0.0
        %298 = vst [vmem:[#allocation3 + $0x28] sm:$0xff] 0.0
        %299 = vst [vmem:[#allocation3 + $0x30] sm:$0xff] 0.0
        %300 = vst [vmem:[#allocation3 + $0x38] sm:$0xff] 0.0
        %301 = vst [vmem:[#allocation3 + $0x40] sm:$0xff] 0.0
        %302 = vst [vmem:[#allocation3 + $0x48] sm:$0xff] 0.0
        %303 = vst [vmem:[#allocation3 + $0x50] sm:$0xff] 0.0
        %304 = vst [vmem:[#allocation3 + $0x58] sm:$0xff] 0.0
        %v305 = vld [vmem:[%s246] sm:$0xff]
        %v306 = vld [vmem:[%s246 + $0x8] sm:$0xff]
        %307 = vst [vmem:[#allocation2] sm:$0xff] %v305
        %308 = vst [vmem:[#allocation2 + $0x8] sm:$0xff] %v306
        %v309 = vld [vmem:[%s255] sm:$0xf]
        %310 = vst [vmem:[#allocation2 + $0x10] sm:$0xf] %v309
        %v311 = vld [vmem:[%s2] sm:$0xff]
        %v312 = vld [vmem:[%s3] sm:$0xff]
        %v313 = vld [vmem:[%s246] sm:$0xff]
        %v314 = vld [vmem:[%s246 + $0x8] sm:$0xff]
        %v317 = vcombine.high %v313, %v313
        %v318 = vcombine.high %v314, %v314
        %321 = vst [vmem:[#allocation3] sm:$0xf] %v313
        %322 = vst [vmem:[#allocation3 + $0x8] sm:$0xf] %v317
        %323 = vst [vmem:[#allocation3 + $0x10] sm:$0xf] %v314
        %324 = vst [vmem:[#allocation3 + $0x18] sm:$0xf] %v318
        %v325 = vld [vmem:[#allocation2] sm:$0xff]
        %v326 = vld [vmem:[#allocation2 + $0x8] sm:$0xff]
        %v327 = vld [vmem:[#allocation2 + $0x10] sm:$0xf]
        %v331 = vcombine.high %v325, %v325
        %v332 = vcombine.high %v326, %v326
        %333 = vrot.lane.b32.xlu0 %v325, 126
        %v334 = vpop.permute.xlu0 %333
        %335 = vrot.lane.b32.xlu0 %v331, 126
        %v336 = vpop.permute.xlu0 %335
        %337 = vrot.lane.b32.xlu0 %v326, 126
        %v338 = vpop.permute.xlu0 %337
        %339 = vrot.lane.b32.xlu0 %v332, 126
        %v340 = vpop.permute.xlu0 %339
        %341 = vrot.lane.b32.xlu0 %v327, 126
        %v342 = vpop.permute.xlu0 %341
        %vm343 = vcmask 1031168
        %v344 = vsel %vm343, %v334, %v336
        %v345 = vsel %vm343, %v336, %v338
        %v346 = vsel %vm343, %v338, %v340
        %v347 = vsel %vm343, %v340, %v342
        %352 = vst [vmem:[#allocation3 + $0x20] sm:$0xf] %v344
        %353 = vst [vmem:[#allocation3 + $0x28] sm:$0xf] %v345
        %354 = vst [vmem:[#allocation3 + $0x30] sm:$0xf] %v346
        %355 = vst [vmem:[#allocation3 + $0x38] sm:$0xf] %v347
        %v356 = vld [vmem:[#allocation2] sm:$0xff]
        %v357 = vld [vmem:[#allocation2 + $0x8] sm:$0xff]
        %v358 = vld [vmem:[#allocation2 + $0x10] sm:$0xf]
        %v362 = vcombine.high %v356, %v356
        %v363 = vcombine.high %v357, %v357
        %364 = vrot.lane.b32.xlu0 %v356, 124
        %v365 = vpop.permute.xlu0 %364
        %366 = vrot.lane.b32.xlu0 %v362, 124
        %v367 = vpop.permute.xlu0 %366
        %368 = vrot.lane.b32.xlu0 %v357, 124
        %v369 = vpop.permute.xlu0 %368
        %370 = vrot.lane.b32.xlu0 %v363, 124
        %v371 = vpop.permute.xlu0 %370
        %372 = vrot.lane.b32.xlu0 %v358, 124
        %v373 = vpop.permute.xlu0 %372
        %vm374 = vcmask 1014784
        %v375 = vsel %vm374, %v365, %v367
        %v376 = vsel %vm374, %v367, %v369
        %v377 = vsel %vm374, %v369, %v371
        %v378 = vsel %vm374, %v371, %v373
        %383 = vst [vmem:[#allocation3 + $0x40] sm:$0xf] %v375
        %384 = vst [vmem:[#allocation3 + $0x48] sm:$0xf] %v376
        %385 = vst [vmem:[#allocation3 + $0x50] sm:$0xf] %v377
        %386 = vst [vmem:[#allocation3 + $0x58] sm:$0xf] %v378
        %v387 = vld [vmem:[#allocation3] sm:$0xff]
        %v388 = vld [vmem:[#allocation3 + $0x8] sm:$0xff]
        %v389 = vld [vmem:[#allocation3 + $0x10] sm:$0xff]
        %v390 = vld [vmem:[#allocation3 + $0x18] sm:$0xff]
        %v391 = vld [vmem:[#allocation3 + $0x20] sm:$0xff]
        %v392 = vld [vmem:[#allocation3 + $0x28] sm:$0xff]
        %v393 = vld [vmem:[#allocation3 + $0x30] sm:$0xff]
        %v394 = vld [vmem:[#allocation3 + $0x38] sm:$0xff]
        %v395 = vld [vmem:[#allocation3 + $0x40] sm:$0xff]
        %v396 = vld [vmem:[#allocation3 + $0x48] sm:$0xff]
        %v397 = vld [vmem:[#allocation3 + $0x50] sm:$0xff]
        %v398 = vld [vmem:[#allocation3 + $0x58] sm:$0xff]
        %400 = vset.pattern.permute.xlu0 0
        %401 = vperm.xlu0 %400, %v312
        %v402 = vpop.permute.xlu0 %401
        %vm404 = vcmask 195584
        %v406 = vsel %vm404, %v311, 0
        %408 = vmatprep.subr.mxu0 %v388
        %409 = vmatpush1.msra.mxu0 %v387
        %410 = vmatprep.subr.mxu0 %v392
        %411 = vmatpush1.msra.mxu0 %v391
        %412 = vmatprep.subr.mxu0 %v396
        %413 = vmatpush1.msra.mxu0 %v395
        %414 = vmatprep.subr.mxu0 0.0
        %415 = vmatpush1.msra.mxu0 0.0
        %416 = vmatprep.subr.mxu0 0.0
        %417 = vmatpush1.msra.mxu0 0.0
        %418 = vmatprep.subr.mxu0 0.0
        %419 = vmatpush1.msra.mxu0 0.0
        %420 = vmatprep.subr.mxu0 0.0
        %421 = vmatpush1.msra.mxu0 0.0
        %422 = vmatprep.subr.mxu0 0.0
        %423 = vmatpush1.msra.mxu0 0.0
        %424 = vmatprep.subr.mxu0 0.0
        %425 = vmatpush1.msra.mxu0 0.0
        %426 = vmatprep.subr.mxu0 0.0
        %427 = vmatpush1.msra.mxu0 0.0
        %428 = vmatprep.subr.mxu0 0.0
        %429 = vmatpush1.msra.mxu0 0.0
        %430 = vmatprep.subr.mxu0 0.0
        %431 = vmatpush1.msra.mxu0 0.0
        %432 = vmatprep.subr.mxu0 0.0
        %433 = vmatpush1.msra.mxu0 0.0
        %434 = vmatprep.subr.mxu0 0.0
        %435 = vmatpush1.msra.mxu0 0.0
        %436 = vmatprep.subr.mxu0 0.0
        %437 = vmatpush1.msra.mxu0 0.0
        %438 = vmatprep.subr.mxu0 0.0
        %439 = vmatpush1.msra.mxu0 0.0
        %440 = vmatprep.subr.mxu0 0.0
        %441 = vmatpush1.msra.mxu0 0.0
        %442 = vmatprep.subr.mxu0 0.0
        %443 = vmatpush1.msra.mxu0 0.0
        %444 = vmatprep.subr.mxu0 0.0
        %445 = vmatpush1.msra.mxu0 0.0
        %446 = vmatprep.subr.mxu0 0.0
        %447 = vmatpush1.msra.mxu0 0.0
        %448 = vmatprep.subr.mxu0 0.0
        %449 = vmatpush1.msra.mxu0 0.0
        %450 = vmatprep.subr.mxu0 0.0
        %451 = vmatpush1.msra.mxu0 0.0
        %452 = vmatprep.subr.mxu0 0.0
        %453 = vmatpush1.msra.mxu0 0.0
        %454 = vmatprep.subr.mxu0 0.0
        %455 = vmatpush1.msra.mxu0 0.0
        %456 = vmatprep.subr.mxu0 0.0
        %457 = vmatpush1.msra.mxu0 0.0
        %458 = vmatprep.subr.mxu0 0.0
        %459 = vmatpush1.msra.mxu0 0.0
        %460 = vmatprep.subr.mxu0 0.0
        %461 = vmatpush1.msra.mxu0 0.0
        %462 = vmatprep.subr.mxu0 0.0
        %463 = vmatpush1.msra.mxu0 0.0
        %464 = vmatprep.subr.mxu0 0.0
        %465 = vmatpush1.msra.mxu0 0.0
        %466 = vmatprep.subr.mxu0 0.0
        %467 = vmatpush1.msra.mxu0 0.0
        %468 = vmatprep.subr.mxu0 0.0
        %469 = vmatpush1.msra.mxu0 0.0
        %470 = vmatprep.subr.mxu0 0.0
        %471 = vmatpush1.msra.mxu0 0.0
        %472 = vmatprep.mubr.f32.mxu0 0.0
        %473 = vmatmul.mubr.f32.gmra.mrb[0].mxu0 %v406
        %v474 = vpop.f32.mrb[0].mxu0
        %v475 = vadd.f32 %v402, %v474
        %v476 = vpop.f32.mrb[0].mxu0
        %v477 = vadd.f32 %v402, %v476
        %478 = vdwg.mxu0
        %479 = vmatprep.subr.mxu0 %v390
        %480 = vmatpush1.msra.mxu0 %v389
        %481 = vmatprep.subr.mxu0 %v394
        %482 = vmatpush1.msra.mxu0 %v393
        %483 = vmatprep.subr.mxu0 %v398
        %484 = vmatpush1.msra.mxu0 %v397
        %485 = vmatprep.subr.mxu0 0.0
        %486 = vmatpush1.msra.mxu0 0.0
        %487 = vmatprep.subr.mxu0 0.0
        %488 = vmatpush1.msra.mxu0 0.0
        %489 = vmatprep.subr.mxu0 0.0
        %490 = vmatpush1.msra.mxu0 0.0
        %491 = vmatprep.subr.mxu0 0.0
        %492 = vmatpush1.msra.mxu0 0.0
        %493 = vmatprep.subr.mxu0 0.0
        %494 = vmatpush1.msra.mxu0 0.0
        %495 = vmatprep.subr.mxu0 0.0
        %496 = vmatpush1.msra.mxu0 0.0
        %497 = vmatprep.subr.mxu0 0.0
        %498 = vmatpush1.msra.mxu0 0.0
        %499 = vmatprep.subr.mxu0 0.0
        %500 = vmatpush1.msra.mxu0 0.0
        %501 = vmatprep.subr.mxu0 0.0
        %502 = vmatpush1.msra.mxu0 0.0
        %503 = vmatprep.subr.mxu0 0.0
        %504 = vmatpush1.msra.mxu0 0.0
        %505 = vmatprep.subr.mxu0 0.0
        %506 = vmatpush1.msra.mxu0 0.0
        %507 = vmatprep.subr.mxu0 0.0
        %508 = vmatpush1.msra.mxu0 0.0
        %509 = vmatprep.subr.mxu0 0.0
        %510 = vmatpush1.msra.mxu0 0.0
        %511 = vmatprep.subr.mxu0 0.0
        %512 = vmatpush1.msra.mxu0 0.0
        %513 = vmatprep.subr.mxu0 0.0
        %514 = vmatpush1.msra.mxu0 0.0
        %515 = vmatprep.subr.mxu0 0.0
        %516 = vmatpush1.msra.mxu0 0.0
        %517 = vmatprep.subr.mxu0 0.0
        %518 = vmatpush1.msra.mxu0 0.0
        %519 = vmatprep.subr.mxu0 0.0
        %520 = vmatpush1.msra.mxu0 0.0
        %521 = vmatprep.subr.mxu0 0.0
        %522 = vmatpush1.msra.mxu0 0.0
        %523 = vmatprep.subr.mxu0 0.0
        %524 = vmatpush1.msra.mxu0 0.0
        %525 = vmatprep.subr.mxu0 0.0
        %526 = vmatpush1.msra.mxu0 0.0
        %527 = vmatprep.subr.mxu0 0.0
        %528 = vmatpush1.msra.mxu0 0.0
        %529 = vmatprep.subr.mxu0 0.0
        %530 = vmatpush1.msra.mxu0 0.0
        %531 = vmatprep.subr.mxu0 0.0
        %532 = vmatpush1.msra.mxu0 0.0
        %533 = vmatprep.subr.mxu0 0.0
        %534 = vmatpush1.msra.mxu0 0.0
        %535 = vmatprep.subr.mxu0 0.0
        %536 = vmatpush1.msra.mxu0 0.0
        %537 = vmatprep.subr.mxu0 0.0
        %538 = vmatpush1.msra.mxu0 0.0
        %539 = vmatprep.subr.mxu0 0.0
        %540 = vmatpush1.msra.mxu0 0.0
        %541 = vmatprep.subr.mxu0 0.0
        %542 = vmatpush1.msra.mxu0 0.0
        %543 = vmatprep.mubr.f32.mxu0 0.0
        %544 = vmatmul.mubr.f32.gmra.mrb[0].mxu0 %v406
        %v545 = vpop.f32.mrb[0].mxu0
        %v546 = vadd.f32 %v402, %v545
        %v547 = vpop.f32.mrb[0].mxu0
        %v548 = vadd.f32 %v402, %v547
        %549 = vdwg.mxu0
        %550 = vst [vmem:[%s284] sm:$0xff] %v475
        %551 = vst [vmem:[%s284 + $0x8] sm:$0xff] %v477
        %552 = vst [vmem:[%s284 + $0x10] sm:$0xff] %v546
        %553 = vst [vmem:[%s284 + $0x18] sm:$0xff] %v548
        %s554 = sand.u32 %s148, 1
        %s555 = scalar_lea.sflag [#allocation6], %s554
        %s556 = sand.u32 %s148, 1
        %s557 = smul.addr %s556, 32
        %s558 = scalar_lea.vmem [#allocation9], %s557
        // Predicated region
        $region45: #{tpu_custom_call.1} parent=35 // pred_check
          %p559 = pneg %p158
        $region46: #{tpu_custom_call.1} parent=35 // pred_check_branch
          %561 = sbr.rel (%p559) target = $region48
        $region47: #{tpu_custom_call.1} parent=35 // pred_region
          %s562 = smul.u32 4, %s29
          %s564 = ssub.s32 512, 512
          %565 = vsyncadd %s555, %s564
          %s566 = smul.addr %s28, 4
          %s567 = sadd.s32 %s562, %s566
          %s568 = smul.addr %s567, 128
          %s569 = scalar_lea.hbm %s4, %s568
          %s571 = sshll.u32 %s558, 4
          %s572 = int_to_ptr.vmem [resolvable:$true] %s571
          %574 = dma.vmem_to_hbm [thread:$0]  %s572, 512, %s569, %s555
        $region48: #{tpu_custom_call.1} parent=35 // pred_fallthru
          _
      $region36: #{tpu_custom_call.1} parent=5 // pred_fallthru
        _
      %p575 = scmp.le.s32.totalorder 2, %s19
      // Predicated region
      $region49: #{tpu_custom_call.1} parent=5 // pred_check
        %p576 = pneg %p575
      $region50: #{tpu_custom_call.1} parent=5 // pred_check_branch
        %578 = sbr.rel (%p576) target = $region52
      $region51: #{tpu_custom_call.1} parent=5 // pred_region
        %s579 = ssub.s32 %s19, 2
        // Predicated region
        $region53: #{tpu_custom_call.1} parent=51 // pred_check
          %p580 = pneg %p164
        $region54: #{tpu_custom_call.1} parent=51 // pred_check_branch
          %582 = sbr.rel (%p580) target = $region56
        $region55: #{tpu_custom_call.1} parent=51 // pred_region
          %s583 = sand.u32 %s149, 1
          %s584 = scalar_lea.sflag [#allocation6], %s583
          %s585 = sand.u32 %s149, 1
          %s586 = smul.addr %s585, 32
          %s587 = scalar_lea.vmem [#allocation9], %s586
          %588 = dma.done %s584, 512
        $region56: #{tpu_custom_call.1} parent=51 // pred_fallthru
          _
      $region52: #{tpu_custom_call.1} parent=5 // pred_fallthru
        _
    $region6: #{tpu_custom_call.1} parent=1 // loop_footer
      %s23 = sadd.s32 1, %s19
    $region7: #{tpu_custom_call.1} parent=1 // loop_footer_branch
      %18 = sbr.rel target = $region3
    $region8: #{tpu_custom_call.1} parent=1 // loop_exit
      _
    %589 = vsyncpa [#allocation5], 1
    %s590 = scalar_lea.sflag [#allocation5], 1
    %591 = vsyncpa %s590, 1
    %592 = vsyncpa [#allocation8], 1
    %s593 = scalar_lea.sflag [#allocation8], 1
    %594 = vsyncpa %s593, 1
    %595 = vsyncpa [#allocation6], 1
    %s596 = scalar_lea.sflag [#allocation6], 1
    %597 = vsyncpa %s596, 1

</llo_original>
